<compile_context>
chip_gen: v6e
topology: v6e:2x2x1
jax: 0.10.0
libtpu: 0.0.40
codegen_flags: <defaults>
</compile_context>

<pallas_src>
import jax
import jax.numpy as jnp
from jax.experimental import pallas as pl
from jax.experimental.pallas import tpu as pltpu


def _tpu_vmem_limit_bytes():
    """Generation-gated scoped-VMEM limit with headroom for Mosaic scratch."""
    cap = 64 * 1024 * 1024  # conservative default: v7x per-TC physical VMEM
    try:
        info = pltpu.get_tpu_info()
        cap = int(getattr(info, "vmem_capacity_bytes", cap))
    except Exception:
        pass
    # 3/4 of physical, capped at 96 MiB: -> 48 MiB on v7x, 96 MiB on v5e/v6e.
    return min((cap * 3) // 4, 96 * 1024 * 1024)


def _choose_tiling(n, c, itemsize):
    """Pick (tile_n, vmem_limit). Double-buffered logits-in + probs-out dominate
    the resident footprint (~4x tile bytes), so per-buffer tile <= vmem_limit/8."""
    vmem_limit = _tpu_vmem_limit_bytes()
    tile_budget = min(vmem_limit // 8, 8 * 1024 * 1024)   # 6 MiB v7x, 8 MiB v5e/v6e
    align = max(8, 32 // max(itemsize, 1))                 # 8 f32 / 16 bf16 / 32 i8
    rows = tile_budget // max(c * itemsize, 1)
    rows = min(rows, n)
    # Keep >= ~4 grid steps when N allows (megacore balance on v7x); each extra
    # step only costs ~0.35 us, negligible vs. streaming a multi-MiB tile.
    rows = min(rows, max(pl.cdiv(n, 4), align))
    rows = max(align, (rows // align) * align)
    return rows, vmem_limit


def _refined_reciprocal(s):
    """EUP approx reciprocal + one Newton-Raphson step -> ~f32-exact, VPU-cheap."""
    inv = pl.reciprocal(s, approx=True)
    return inv * (2.0 - s * inv)


def _softmax_only_kernel(logits_ref, probs_ref):
    logits = logits_ref[...].astype(jnp.float32)
    m = jnp.max(logits, axis=-1, keepdims=True)
    e = jnp.exp(logits - m)
    s = jnp.sum(e, axis=-1, keepdims=True)
    inv = _refined_reciprocal(s)
    probs_ref[...] = (e * inv).astype(probs_ref.dtype)


def _make_softmax_ce_kernel(temp: float):
    inv_temp = 1.0 / float(temp)

    def kernel(logits_ref, labels_ref, probs_ref, nll_ref):
        logits = logits_ref[...].astype(jnp.float32)
        tn, c = logits.shape

        # --- softmax(logits, dim=1) ---
        m = jnp.max(logits, axis=-1, keepdims=True)
        e = jnp.exp(logits - m)
        s = jnp.sum(e, axis=-1, keepdims=True)
        inv = _refined_reciprocal(s)
        probs = e * inv
        probs_ref[...] = probs.astype(probs_ref.dtype)

        # --- cross_entropy(probs / temp, labels): per-row NLL ---
        scaled = probs * inv_temp
        # max(probs) along a row is exactly 1/sum(exp) (the arg-max logit maps
        # to exp(0) == 1), so reuse `inv` instead of a second XLU max-reduce.
        # Any consistent shift keeps the log-sum-exp mathematically exact.
        m2 = inv * inv_temp
        lse = jnp.log(jnp.sum(jnp.exp(scaled - m2), axis=-1, keepdims=True)) + m2

        labels = labels_ref[...]                                   # (tn, 1)
        cls_ids = jax.lax.broadcasted_iota(jnp.int32, (tn, c), 1)
        picked = jnp.sum(jnp.where(cls_ids == labels, scaled, 0.0),
                         axis=-1, keepdims=True)                   # scaled[row, label]
        # Rows of the boundary block past N are never stored (Pallas masks the
        # boundary store), so no validity mask is needed here.
        nll_ref[...] = lse - picked

    return kernel


class SoftmaxPallas:
    """JAX/Pallas equivalent of the PyTorch `Softmax` loss module."""

    def __init__(self, temp: float):
        self.temp = float(temp)
        self._cache = {}

    def _build(self, n, c, dtype, with_labels, tile_n, vmem_limit):
        key = (n, c, jnp.dtype(dtype).name, with_labels, tile_n, vmem_limit)
        fn = self._cache.get(key)
        if fn is not None:
            return fn

        grid_n = pl.cdiv(n, tile_n)
        itemsize = jnp.dtype(dtype).itemsize
        cparams = pltpu.CompilerParams(
            dimension_semantics=("parallel",),
            vmem_limit_bytes=int(vmem_limit),
        )

        if with_labels:
            cost = pl.CostEstimate(
                flops=int(7 * n * c),
                transcendentals=int(2 * n * c + 3 * n),
                bytes_accessed=int(2 * n * c * itemsize + 8 * n),
            )
            fn = pl.pallas_call(
                _make_softmax_ce_kernel(self.temp),
                out_shape=(
                    jax.ShapeDtypeStruct((n, c), dtype),
                    jax.ShapeDtypeStruct((n, 1), jnp.float32),
                ),
                grid_spec=pltpu.PrefetchScalarGridSpec(
                    num_scalar_prefetch=0,
                    grid=(grid_n,),
                    in_specs=[
                        pl.BlockSpec((tile_n, c), lambda i: (i, 0)),
                        pl.BlockSpec((tile_n, 1), lambda i: (i, 0)),
                    ],
                    out_specs=(
                        pl.BlockSpec((tile_n, c), lambda i: (i, 0)),
                        pl.BlockSpec((tile_n, 1), lambda i: (i, 0)),
                    ),
                ),
                compiler_params=cparams,
                cost_estimate=cost,
            )
        else:
            cost = pl.CostEstimate(
                flops=int(4 * n * c),
                transcendentals=int(n * c + 2 * n),
                bytes_accessed=int(2 * n * c * itemsize),
            )
            fn = pl.pallas_call(
                _softmax_only_kernel,
                out_shape=jax.ShapeDtypeStruct((n, c), dtype),
                grid_spec=pltpu.PrefetchScalarGridSpec(
                    num_scalar_prefetch=0,
                    grid=(grid_n,),
                    in_specs=[pl.BlockSpec((tile_n, c), lambda i: (i, 0))],
                    out_specs=pl.BlockSpec((tile_n, c), lambda i: (i, 0)),
                ),
                compiler_params=cparams,
                cost_estimate=cost,
            )

        self._cache[key] = fn
        return fn

    def __call__(self, x, logits, labels=None):
        # `x` is accepted (as in the PyTorch module) but unused by the forward.
        n, c = logits.shape
        itemsize = jnp.dtype(logits.dtype).itemsize
        tile_n, vmem_limit = _choose_tiling(n, c, itemsize)

        if labels is None:
            fn = self._build(n, c, logits.dtype, False, tile_n, vmem_limit)
            probs = fn(logits)
            return probs, 0

        labels_col = labels.astype(jnp.int32).reshape(n, 1)
        fn = self._build(n, c, logits.dtype, True, tile_n, vmem_limit)
        probs, nll = fn(logits, labels_col)
        loss = jnp.sum(nll) / jnp.float32(n)   # mean reduction over true N
        return probs, loss


def _reference(logits, labels, temp):
    """Pure-JAX reference mirroring the PyTorch forward."""
    probs = jax.nn.softmax(logits, axis=1)
    scaled = probs / temp
    log_probs = jax.nn.log_softmax(scaled, axis=1)
    nll = -jnp.take_along_axis(log_probs, labels[:, None], axis=1)[:, 0]
    return probs, jnp.mean(nll)


if __name__ == "__main__":
    key = jax.random.PRNGKey(0)
    k_x, k_logits, k_labels = jax.random.split(key, 3)

    # Small shapes; N deliberately not a multiple of the row tile to exercise
    # the in-kernel ragged boundary handling and the multi-tile per-row NLL path.
    N, C, D = 10, 128, 16
    temp = 0.5

    x = jax.random.normal(k_x, (N, D), dtype=jnp.float32)           # unused feature input
    logits = jax.random.normal(k_logits, (N, C), dtype=jnp.float32)
    labels = jax.random.randint(k_labels, (N,), 0, C, dtype=jnp.int32)

    model = SoftmaxPallas(temp)

    # path with labels
    probs, loss = model(x, logits, labels)
    probs = jax.block_until_ready(probs)
    loss = jax.block_until_ready(loss)

    # path without labels
    probs_nl, loss_nl = model(x, logits, labels=None)
    probs_nl = jax.block_until_ready(probs_nl)

    # sanity check against pure-JAX reference (NR-refined reciprocal -> tight tol)
    ref_probs, ref_loss = _reference(logits, labels, temp)
    assert probs.shape == (N, C)
    assert jnp.allclose(probs, ref_probs, atol=1e-5, rtol=1e-5)
    assert jnp.allclose(loss, ref_loss, atol=1e-5, rtol=1e-5)
    assert jnp.allclose(probs_nl, ref_probs, atol=1e-5, rtol=1e-5)
    assert loss_nl == 0

    print("KERNEL_OK")
</pallas_src>

<mosaic_0001>
module attributes {stable_mosaic.version = 11 : i64} {
  func.func @kernel(%arg0: i32, %arg1: memref<8x128xf32, #tpu.memory_space<vmem>>, %arg2: memref<8x1xi32, #tpu.memory_space<vmem>>, %arg3: memref<8x128xf32, #tpu.memory_space<vmem>>, %arg4: memref<8x1xf32, #tpu.memory_space<vmem>>) attributes {dimension_semantics = [#tpu.dimension_semantics<parallel>], iteration_bounds = array<i64: 2>, scalar_prefetch = 0 : i64, scratch_operands = 0 : i64, tpu.core_type = #tpu.core_type<tc>, window_params = [{transform_indices = @transform_0, window_bounds = array<i64: 8, 128>}, {transform_indices = @transform_1, window_bounds = array<i64: 8, 1>}, {transform_indices = @transform_2, window_bounds = array<i64: 8, 128>}, {transform_indices = @transform_3, window_bounds = array<i64: 8, 1>}]} {
    %c0 = arith.constant 0 : index
    %c0_0 = arith.constant 0 : index
    %0 = vector.load %arg1[%c0, %c0_0] : memref<8x128xf32, #tpu.memory_space<vmem>>, vector<8x128xf32>
    %cst = arith.constant dense<0xFF800000> : vector<8xf32>
    %1 = vector.multi_reduction <maximumf>, %0, %cst [1] : vector<8x128xf32> to vector<8xf32>
    %2 = vector.shape_cast %1 : vector<8xf32> to vector<8x1xf32>
    %3 = vector.broadcast %2 : vector<8x1xf32> to vector<8x128xf32>
    %4 = arith.subf %0, %3 : vector<8x128xf32>
    %5 = math.exp %4 : vector<8x128xf32>
    %cst_1 = arith.constant dense<0.000000e+00> : vector<8xf32>
    %6 = vector.multi_reduction <add>, %5, %cst_1 [1] : vector<8x128xf32> to vector<8xf32>
    %7 = vector.shape_cast %6 : vector<8xf32> to vector<8x1xf32>
    %8 = tpu.reciprocal %7 {approx = true} : vector<8x1xf32> -> vector<8x1xf32>
    %9 = arith.mulf %7, %8 : vector<8x1xf32>
    %cst_2 = arith.constant 2.000000e+00 : f32
    %10 = vector.broadcast %cst_2 : f32 to vector<8x1xf32>
    %11 = arith.subf %10, %9 : vector<8x1xf32>
    %12 = arith.mulf %8, %11 : vector<8x1xf32>
    %13 = vector.broadcast %12 : vector<8x1xf32> to vector<8x128xf32>
    %14 = arith.mulf %5, %13 : vector<8x128xf32>
    %c0_3 = arith.constant 0 : index
    %c0_4 = arith.constant 0 : index
    %15 = vector.load %arg3[%c0_3, %c0_4] : memref<8x128xf32, #tpu.memory_space<vmem>>, vector<8x128xf32>
    tpu.vector_store %arg3[%c0_3, %c0_4], %14 {strides = array<i32>} : memref<8x128xf32, #tpu.memory_space<vmem>>, vector<8x128xf32>,
    %cst_5 = arith.constant 2.000000e+00 : f32
    %16 = vector.broadcast %cst_5 : f32 to vector<8x128xf32>
    %17 = arith.mulf %14, %16 : vector<8x128xf32>
    %cst_6 = arith.constant 2.000000e+00 : f32
    %18 = vector.broadcast %cst_6 : f32 to vector<8x1xf32>
    %19 = arith.mulf %12, %18 : vector<8x1xf32>
    %20 = vector.broadcast %19 : vector<8x1xf32> to vector<8x128xf32>
    %21 = arith.subf %17, %20 : vector<8x128xf32>
    %22 = math.exp %21 : vector<8x128xf32>
    %cst_7 = arith.constant dense<0.000000e+00> : vector<8xf32>
    %23 = vector.multi_reduction <add>, %22, %cst_7 [1] : vector<8x128xf32> to vector<8xf32>
    %24 = vector.shape_cast %23 : vector<8xf32> to vector<8x1xf32>
    %25 = math.log %24 : vector<8x1xf32>
    %26 = arith.addf %25, %19 : vector<8x1xf32>
    %c0_8 = arith.constant 0 : index
    %c0_9 = arith.constant 0 : index
    %27 = vector.load %arg2[%c0_8, %c0_9] : memref<8x1xi32, #tpu.memory_space<vmem>>, vector<8x1xi32>
    %28 = tpu.iota {dimensions = array<i32: 1>} : vector<8x128xi32>
    %29 = vector.broadcast %27 : vector<8x1xi32> to vector<8x128xi32>
    %30 = arith.cmpi eq, %28, %29 : vector<8x128xi32>
    %cst_10 = arith.constant 0.000000e+00 : f32
    %31 = vector.broadcast %cst_10 : f32 to vector<8x128xf32>
    %32 = arith.select %30, %17, %31 : vector<8x128xi1>, vector<8x128xf32>
    %cst_11 = arith.constant dense<0.000000e+00> : vector<8xf32>
    %33 = vector.multi_reduction <add>, %32, %cst_11 [1] : vector<8x128xf32> to vector<8xf32>
    %34 = vector.shape_cast %33 : vector<8xf32> to vector<8x1xf32>
    %35 = arith.subf %26, %34 : vector<8x1xf32>
    %c0_12 = arith.constant 0 : index
    %c0_13 = arith.constant 0 : index
    %36 = vector.load %arg4[%c0_12, %c0_13] : memref<8x1xf32, #tpu.memory_space<vmem>>, vector<8x1xf32>
    tpu.vector_store %arg4[%c0_12, %c0_13], %35 {strides = array<i32>} : memref<8x1xf32, #tpu.memory_space<vmem>>, vector<8x1xf32>,
    return
  }
  func.func @transform_0(%arg0: i32) -> (i32, i32) {
    %c0_i32 = arith.constant 0 : i32
    %c0_i32_0 = arith.constant 0 : i32
    return %arg0, %c0_i32 : i32, i32
  }
  func.func @transform_1(%arg0: i32) -> (i32, i32) {
    %c0_i32 = arith.constant 0 : i32
    %c0_i32_0 = arith.constant 0 : i32
    return %arg0, %c0_i32 : i32, i32
  }
  func.func @transform_2(%arg0: i32) -> (i32, i32) {
    %c0_i32 = arith.constant 0 : i32
    %c0_i32_0 = arith.constant 0 : i32
    return %arg0, %c0_i32 : i32, i32
  }
  func.func @transform_3(%arg0: i32) -> (i32, i32) {
    %c0_i32 = arith.constant 0 : i32
    %c0_i32_0 = arith.constant 0 : i32
    return %arg0, %c0_i32 : i32, i32
  }
}

</mosaic_0001>

<llo_original>
// kernel: tpu_custom_call.1
$region0: #{tpu_custom_call.1}
  #allocation0 [shape = 'u32[]', space=smem, size = 0x4, offset = 0x4, fixed_abs, tag = 'smem constant byte address 0x4 - core index']
  #allocation1 [shape = 'u32[144,128]{1,0:T(1,128)}', space=vmem, size = 0x12000, scoped, tag = 'internal scratch']
  %s0 = inlined_call_operand.vmem [shape: f32[10,128], index: 0, kind: input, shape index: {}]
  %s1 = inlined_call_operand.vmem [shape: s32[10,1], index: 1, kind: input, shape index: {}]
  %s2 = inlined_call_operand.hbm [shape: f32[10,128], index: 2, kind: output, shape index: {0}]
  %s3 = inlined_call_operand.vmem [shape: f32[10,1], index: 3, kind: output, shape index: {1}]
  %4 = xla_tuple %s2, %s3
  %s5 = sld [smem:[#allocation0]]
  $region49: #{tpu_custom_call.1} parent=0
    _
  %s7 = ssub.s32 1, %s5
  %s8 = scalar_select 0, %s7, %s5
  $region1: #{tpu_custom_call.1} parent=0
    #allocation2 [shape = 'u8[8192]{0}', space=vmem, size = 0x2000, scoped, tag = 'output window, operand 0']
    #allocation3 [shape = 's32[2]{0}', space=sflag, size = 0x8, scoped, tag = 'scoped memory for tpu_custom_call.1']
    %9 = vsyncpa [#allocation3], 0
    %s10 = scalar_lea.sflag [#allocation3], 1
    %11 = vsyncpa %s10, 0
    loop: start=0, step=1, limit=4
    $region2: #{tpu_custom_call.1} parent=1 // loop_pre_header
      _
    $region3: #{tpu_custom_call.1} parent=1 // loop_header
      %s13 = sphi 0, %s17
      %p14 = scmp.ge.s32.totalorder %s13, 4
      %s23 = sphi 0, %s25
      %s26 = sphi 0, %s23
      %s27 = sphi 0, %s26
      %s43 = sphi 0, %s27
      %s49 = sphi 0, %s51
      %s52 = sphi 0, %s49
      %s53 = sphi 0, %s52
      %s69 = sphi 0, %s53
      %s75 = sphi 0, %s77
      %s78 = sphi 0, %s75
      %s79 = sphi 0, %s78
      %s95 = sphi 0, %s79
      %s101 = sphi 0, %s103
      %s104 = sphi 0, %s101
      %s105 = sphi 0, %s104
      %s121 = sphi 0, %s105
    $region4: #{tpu_custom_call.1} parent=1 // loop_header_branch
      %16 = sbr.rel (%p14) target = $region8
    $region5: #{tpu_custom_call.1} parent=1 // loop_body
      %s18 = ssub.s32 %s13, 1
      %s19 = ssub.s32 %s13, 2
      %s20 = sadd.s32 %s13, 1
      %s21 = ssub.s32 %s13, %s20
      %p22 = scmp.eq.s32.totalorder %s21, 0
      %s24 = sadd.s32 %s23, 1
      %s25 = scalar_select %p22, %s23, %s24
      %p28 = pneg %p22
      %p29 = scmp.eq.s32.totalorder %s13, 1
      %p30 = por %p28, %p29
      %p31 = scmp.ne.s32.totalorder %s23, %s26
      %p32 = scmp.eq.s32.totalorder %s13, 0
      %p33 = por %p31, %p32
      %p34 = scmp.ne.s32.totalorder %s23, %s26
      %p35 = scmp.eq.s32.totalorder %s18, 1
      %p36 = por %p34, %p35
      %p37 = scmp.ne.s32.totalorder %s26, %s27
      %p38 = scmp.eq.s32.totalorder %s18, 0
      %p39 = por %p37, %p38
      %p40 = scmp.ne.s32.totalorder %s26, %s27
      %p41 = scmp.eq.s32.totalorder %s19, 1
      %p42 = por %p40, %p41
      %p44 = scmp.ne.s32.totalorder %s27, %s43
      %p45 = scmp.eq.s32.totalorder %s19, 0
      %p46 = por %p44, %p45
      %s47 = ssub.s32 %s13, %s20
      %p48 = scmp.eq.s32.totalorder %s47, 0
      %s50 = sadd.s32 %s49, 1
      %s51 = scalar_select %p48, %s49, %s50
      %p54 = pneg %p48
      %p55 = scmp.eq.s32.totalorder %s13, 1
      %p56 = por %p54, %p55
      %p57 = scmp.ne.s32.totalorder %s49, %s52
      %p58 = scmp.eq.s32.totalorder %s13, 0
      %p59 = por %p57, %p58
      %p60 = scmp.ne.s32.totalorder %s49, %s52
      %p61 = scmp.eq.s32.totalorder %s18, 1
      %p62 = por %p60, %p61
      %p63 = scmp.ne.s32.totalorder %s52, %s53
      %p64 = scmp.eq.s32.totalorder %s18, 0
      %p65 = por %p63, %p64
      %p66 = scmp.ne.s32.totalorder %s52, %s53
      %p67 = scmp.eq.s32.totalorder %s19, 1
      %p68 = por %p66, %p67
      %p70 = scmp.ne.s32.totalorder %s53, %s69
      %p71 = scmp.eq.s32.totalorder %s19, 0
      %p72 = por %p70, %p71
      %s73 = ssub.s32 %s13, %s20
      %p74 = scmp.eq.s32.totalorder %s73, 0
      %s76 = sadd.s32 %s75, 1
      %s77 = scalar_select %p74, %s75, %s76
      %p80 = pneg %p74
      %p81 = scmp.eq.s32.totalorder %s13, 1
      %p82 = por %p80, %p81
      %p83 = scmp.ne.s32.totalorder %s75, %s78
      %p84 = scmp.eq.s32.totalorder %s13, 0
      %p85 = por %p83, %p84
      %p86 = scmp.ne.s32.totalorder %s75, %s78
      %p87 = scmp.eq.s32.totalorder %s18, 1
      %p88 = por %p86, %p87
      %p89 = scmp.ne.s32.totalorder %s78, %s79
      %p90 = scmp.eq.s32.totalorder %s18, 0
      %p91 = por %p89, %p90
      %p92 = scmp.ne.s32.totalorder %s78, %s79
      %p93 = scmp.eq.s32.totalorder %s19, 1
      %p94 = por %p92, %p93
      %p96 = scmp.ne.s32.totalorder %s79, %s95
      %p97 = scmp.eq.s32.totalorder %s19, 0
      %p98 = por %p96, %p97
      %s99 = ssub.s32 %s13, %s20
      %p100 = scmp.eq.s32.totalorder %s99, 0
      %s102 = sadd.s32 %s101, 1
      %s103 = scalar_select %p100, %s101, %s102
      %p106 = pneg %p100
      %p107 = scmp.eq.s32.totalorder %s13, 1
      %p108 = por %p106, %p107
      %p109 = scmp.ne.s32.totalorder %s101, %s104
      %p110 = scmp.eq.s32.totalorder %s13, 0
      %p111 = por %p109, %p110
      %p112 = scmp.ne.s32.totalorder %s101, %s104
      %p113 = scmp.eq.s32.totalorder %s18, 1
      %p114 = por %p112, %p113
      %p115 = scmp.ne.s32.totalorder %s104, %s105
      %p116 = scmp.eq.s32.totalorder %s18, 0
      %p117 = por %p115, %p116
      %p118 = scmp.ne.s32.totalorder %s104, %s105
      %p119 = scmp.eq.s32.totalorder %s19, 1
      %p120 = por %p118, %p119
      %p122 = scmp.ne.s32.totalorder %s105, %s121
      %p123 = scmp.eq.s32.totalorder %s19, 0
      %p124 = por %p122, %p123
      %p125 = scmp.le.s32.totalorder 1, %s13
      %p126 = scmp.lt.s32.totalorder %s13, 3
      %p127 = pnand %p125, %p126
      %p128 = pneg %p127
      // Predicated region
      $region9: #{tpu_custom_call.1} parent=5 // pred_check
        _
      $region10: #{tpu_custom_call.1} parent=5 // pred_check_branch
        %130 = sbr.rel (%p127) target = $region12
      $region11: #{tpu_custom_call.1} parent=5 // pred_region
        %s131 = ssub.s32 %s13, 1
      $region12: #{tpu_custom_call.1} parent=5 // pred_fallthru
        _
      %p132 = scmp.lt.s32.totalorder %s13, 2
      // Predicated region
      $region13: #{tpu_custom_call.1} parent=5 // pred_check
        %p133 = pneg %p132
      $region14: #{tpu_custom_call.1} parent=5 // pred_check_branch
        %135 = sbr.rel (%p133) target = $region16
      $region15: #{tpu_custom_call.1} parent=5 // pred_region
        // Predicated region
        $region17: #{tpu_custom_call.1} parent=15 // pred_check
          %p136 = pneg %p33
        $region18: #{tpu_custom_call.1} parent=15 // pred_check_branch
          %138 = sbr.rel (%p136) target = $region20
        $region19: #{tpu_custom_call.1} parent=15 // pred_region
          %p139 = scmp.lt.s32.totalorder %s13, 1
          %s140 = scalar_select %p139, %s13, 1
          %s141 = smul.addr %s140, 8
          %s142 = scalar_lea.vmem %s0, %s141
        $region20: #{tpu_custom_call.1} parent=15 // pred_fallthru
          _
        // Predicated region
        $region21: #{tpu_custom_call.1} parent=15 // pred_check
          %p143 = pneg %p59
        $region22: #{tpu_custom_call.1} parent=15 // pred_check_branch
          %145 = sbr.rel (%p143) target = $region24
        $region23: #{tpu_custom_call.1} parent=15 // pred_region
          %p146 = scmp.lt.s32.totalorder %s13, 1
          %s147 = scalar_select %p146, %s13, 1
          %s148 = smul.addr %s147, 8
          %s149 = scalar_lea.vmem %s1, %s148
        $region24: #{tpu_custom_call.1} parent=15 // pred_fallthru
          _
      $region16: #{tpu_custom_call.1} parent=5 // pred_fallthru
        _
      %p150 = scmp.le.s32.totalorder 1, %s13
      %p151 = scmp.lt.s32.totalorder %s13, 3
      %p152 = pnand %p150, %p151
      %p153 = pneg %p152
      // Predicated region
      $region25: #{tpu_custom_call.1} parent=5 // pred_check
        _
      $region26: #{tpu_custom_call.1} parent=5 // pred_check_branch
        %155 = sbr.rel (%p152) target = $region28
      $region27: #{tpu_custom_call.1} parent=5 // pred_region
        %s156 = ssub.s32 %s13, 1
        %p157 = scmp.lt.s32.totalorder %s18, 1
        %s158 = scalar_select %p157, %s18, 1
        %s159 = smul.addr %s158, 8
        %s160 = scalar_lea.vmem %s0, %s159
        %p161 = pneg %p39
        %p162 = pneg %p36
        %p163 = scmp.lt.s32.totalorder %s18, 1
        %s164 = scalar_select %p163, %s18, 1
        %s165 = smul.addr %s164, 8
        %s166 = scalar_lea.vmem %s1, %s165
        %p167 = pneg %p65
        %p168 = pneg %p62
        %p169 = pneg %p91
        %p170 = pneg %p88
        %s171 = sand.u32 %s78, 1
        %s172 = scalar_lea.sflag [#allocation3], %s171
        %s173 = sand.u32 %s78, 1
        %s174 = smul.addr %s173, 8
        %s175 = scalar_lea.vmem [#allocation2], %s174
        %p176 = pneg %p117
        %p177 = pneg %p114
        %p178 = scmp.lt.s32.totalorder %s18, 1
        %s179 = scalar_select %p178, %s18, 1
        %s180 = smul.addr %s179, 8
        %s181 = scalar_lea.vmem %s3, %s180
        %p182 = scmp.lt.s32.totalorder %s18, 1
        %s183 = scalar_select %p182, %s18, 1
        %s184 = smul.addr %s183, 8
        %s185 = scalar_lea.vmem %s0, %s184
        %p186 = scmp.lt.s32.totalorder %s18, 1
        %s187 = scalar_select %p186, %s18, 1
        %s188 = smul.addr %s187, 8
        %s189 = scalar_lea.vmem %s1, %s188
        %p190 = scmp.lt.s32.totalorder %s18, 1
        %s191 = scalar_select %p190, %s18, 1
        %s192 = smul.addr %s191, 8
        %s193 = scalar_lea.vmem %s3, %s192
        %v194 = vld [vmem:[%s185] sm:$0xff]
        %195 = vmax.xlane.f32.xlu0 %v194
        %v196 = vpop.xlane.xlu0 %195
        %v197 = vsub.f32 %v194, %v196
        %v198 = vmul.f32 %v197, 1.442695
        %v199 = vpow.pop %v198
        %200 = vadd.xlane.f32.xlu0 %v199
        %v201 = vpop.xlane.xlu0 %200
        %v202 = vrcp.pop %v201
        %v203 = vmul.f32 %v201, %v202
        %v204 = vsub.f32 2.0, %v203
        %v205 = vmul.f32 %v202, %v204
        %v206 = vmul.f32 %v199, %v205
        %207 = vst [vmem:[%s175] sm:$0xff] %v206
        %v208 = vmul.f32 %v206, 2.0
        %v209 = vmul.f32 %v205, 2.0
        %v210 = vsub.f32 %v208, %v209
        %v211 = vmul.f32 %v210, 1.442695
        %v212 = vpow.pop %v211
        %213 = vadd.xlane.f32.xlu0 %v212
        %v214 = vpop.xlane.xlu0 %213
        %v215 = vlog2.pop %v214
        %v216 = vmul.f32 %v215, 0.6931472
        %v217 = vadd.f32 %v216, %v209
        %v218 = vld [vmem:[%s189] sm:$0xff]
        %v219 = vlaneseq
        %v220 = vand.u32 %v219, 127
        %221 = vset.pattern.permute.xlu0 0
        %222 = vperm.xlu0 %221, %v218
        %v223 = vpop.permute.xlu0 %222
        %vm224 = vcmp.eq.s32.totalorder %v220, %v223
        %v225 = vsel %vm224, %v208, 0.0
        %226 = vadd.xlane.f32.xlu0 %v225
        %v227 = vpop.xlane.xlu0 %226
        %v228 = vsub.f32 %v217, %v227
        %vm229 = vcmask 7168
        %230 = vst.msk [vmem:[%s193] sm:$0xff] %vm229, %v228
        %s231 = sand.u32 %s78, 1
        %s232 = scalar_lea.sflag [#allocation3], %s231
        %s233 = sand.u32 %s78, 1
        %s234 = smul.addr %s233, 8
        %s235 = scalar_lea.vmem [#allocation2], %s234
        %p236 = scmp.lt.s32.totalorder %s18, 1
        %s237 = scalar_select %p236, %s18, 1
        %s238 = smul.addr %s237, 8
        %s239 = scalar_lea.vmem %s3, %s238
        // Predicated region
        $region29: #{tpu_custom_call.1} parent=27 // pred_check
          %p240 = pneg %p88
        $region30: #{tpu_custom_call.1} parent=27 // pred_check_branch
          %242 = sbr.rel (%p240) target = $region32
        $region31: #{tpu_custom_call.1} parent=27 // pred_region
          %s244 = ssub.s32 128, 128
          %245 = vsyncadd %s232, %s244
          %s246 = smul.addr %s18, 128
          %s247 = scalar_lea.hbm %s2, %s246
          %s249 = sshll.u32 %s235, 4
          %s250 = int_to_ptr.vmem [resolvable:$true] %s249
          %252 = dma.vmem_to_hbm [thread:$0]  %s250, 128, %s247, %s232
        $region32: #{tpu_custom_call.1} parent=27 // pred_fallthru
          _
        // Predicated region
        $region33: #{tpu_custom_call.1} parent=27 // pred_check
          %p253 = pneg %p114
        $region34: #{tpu_custom_call.1} parent=27 // pred_check_branch
          %255 = sbr.rel (%p253) target = $region36
        $region35: #{tpu_custom_call.1} parent=27 // pred_region
          _
        $region36: #{tpu_custom_call.1} parent=27 // pred_fallthru
          _
      $region28: #{tpu_custom_call.1} parent=5 // pred_fallthru
        _
      %p256 = scmp.le.s32.totalorder 2, %s13
      // Predicated region
      $region37: #{tpu_custom_call.1} parent=5 // pred_check
        %p257 = pneg %p256
      $region38: #{tpu_custom_call.1} parent=5 // pred_check_branch
        %259 = sbr.rel (%p257) target = $region40
      $region39: #{tpu_custom_call.1} parent=5 // pred_region
        %s260 = ssub.s32 %s13, 2
        // Predicated region
        $region41: #{tpu_custom_call.1} parent=39 // pred_check
          %p261 = pneg %p94
        $region42: #{tpu_custom_call.1} parent=39 // pred_check_branch
          %263 = sbr.rel (%p261) target = $region44
        $region43: #{tpu_custom_call.1} parent=39 // pred_region
          %s264 = sand.u32 %s79, 1
          %s265 = scalar_lea.sflag [#allocation3], %s264
          %s266 = sand.u32 %s79, 1
          %s267 = smul.addr %s266, 8
          %s268 = scalar_lea.vmem [#allocation2], %s267
          %269 = dma.done %s265, 128
        $region44: #{tpu_custom_call.1} parent=39 // pred_fallthru
          _
        // Predicated region
        $region45: #{tpu_custom_call.1} parent=39 // pred_check
          %p270 = pneg %p120
        $region46: #{tpu_custom_call.1} parent=39 // pred_check_branch
          %272 = sbr.rel (%p270) target = $region48
        $region47: #{tpu_custom_call.1} parent=39 // pred_region
          %p273 = scmp.lt.s32.totalorder %s19, 1
          %s274 = scalar_select %p273, %s19, 1
          %s275 = smul.addr %s274, 8
          %s276 = scalar_lea.vmem %s3, %s275
        $region48: #{tpu_custom_call.1} parent=39 // pred_fallthru
          _
      $region40: #{tpu_custom_call.1} parent=5 // pred_fallthru
        _
    $region6: #{tpu_custom_call.1} parent=1 // loop_footer
      %s17 = sadd.s32 1, %s13
    $region7: #{tpu_custom_call.1} parent=1 // loop_footer_branch
      %12 = sbr.rel target = $region3
    $region8: #{tpu_custom_call.1} parent=1 // loop_exit
      _
    %277 = vsyncpa [#allocation3], 1
    %s278 = scalar_lea.sflag [#allocation3], 1
    %279 = vsyncpa %s278, 1

</llo_original>
